<compile_context>
chip_gen: v6e
topology: v6e:2x2x1
jax: 0.10.0
libtpu: 0.0.40
codegen_flags: <defaults>
</compile_context>

<pallas_src>
import functools

import jax
import jax.numpy as jnp
from jax.experimental import pallas as pl
from jax.experimental.pallas import tpu as pltpu


# ----------------------------------------------------------------------------- helpers
def _round_up(x, m):
    return ((x + m - 1) // m) * m


def _largest_divisor_tile(dim, candidates):
    for t in candidates:
        if dim % t == 0:
            return t
    return candidates[-1]


def _pair(v):
    return (v, v) if isinstance(v, int) else tuple(v)


def _choose_tiles(M, Kp, Np, itemsize, budget_bytes=24 << 20):
    """Pick (tm, tn, tk): lane-dense N/K tiles, then the largest M tile that keeps
    double-buffered input/output blocks + the f32 accumulator within budget."""
    tn = _largest_divisor_tile(Np, (512, 256, 128))
    tk = _largest_divisor_tile(Kp, (512, 256, 128))
    m_cap = max(8, _round_up(M, 8))
    for tm in (1024, 512, 256, 128, 64, 32, 16, 8):
        if tm > m_cap and tm != 8:
            continue
        need = 2 * (tm * tk + tk * tn + tm * tn) * itemsize + tm * tn * 4 + (2 << 20)
        if need <= budget_bytes:
            return min(tm, m_cap) if tm <= m_cap else 8, tn, tk
    return 8, tn, tk


def _im2col(x, kh, kw, stride, padding, dilation):
    """x: (N, C, H, W) -> patches (N*OH*OW, KH*KW*C). Pure slicing glue (no conv op).
    Feature order is (ky, kx, c), matching the weight matrix layout below."""
    n, c, h, w = x.shape
    sh, sw = stride
    ph, pw = padding
    dh, dw = dilation
    oh = (h + 2 * ph - dh * (kh - 1) - 1) // sh + 1
    ow = (w + 2 * pw - dw * (kw - 1) - 1) // sw + 1
    xp = jnp.pad(x, ((0, 0), (0, 0), (ph, ph), (pw, pw)))
    cols = []
    for ky in range(kh):
        for kx in range(kw):
            y0 = ky * dh
            x0 = kx * dw
            patch = jax.lax.slice(
                xp,
                (0, 0, y0, x0),
                (n, c, y0 + (oh - 1) * sh + 1, x0 + (ow - 1) * sw + 1),
                (1, 1, sh, sw),
            )  # (N, C, OH, OW)
            cols.append(jnp.transpose(patch, (0, 2, 3, 1)))  # (N, OH, OW, C)
    patches = jnp.concatenate(cols, axis=-1)             # (N, OH, OW, KH*KW*C)
    patches = patches.reshape(n * oh * ow, kh * kw * c)  # feature = (ky*KW+kx)*C + c
    return patches, oh, ow


# ----------------------------------------------------------------------------- kernel
def _conv_bn_matmul_kernel(a_ref, w_ref, scale_ref, shift_ref, o_ref, acc_ref):
    """One (tm, tn) output tile; K reduction over grid axis 2 (f32 accumulator).
    Epilogue fuses the folded BatchNorm: y = acc * scale + shift."""

    @pl.when(pl.program_id(2) == 0)
    def _():
        acc_ref[...] = jnp.zeros_like(acc_ref)

    acc_ref[...] += jnp.dot(a_ref[...], w_ref[...], preferred_element_type=jnp.float32)

    @pl.when(pl.program_id(2) == pl.num_programs(2) - 1)
    def _():
        y = acc_ref[...] * scale_ref[...] + shift_ref[...]
        o_ref[...] = y.astype(o_ref.dtype)


@functools.partial(jax.jit, static_argnames=("tm", "tn", "tk"))
def _matmul_bn(a, w, scale, shift, *, tm, tn, tk):
    """a: (Mp, Kp), w: (Kp, Np), scale/shift: (1, Np) f32. All dims multiples of tiles."""
    M, K = a.shape
    _, N = w.shape
    grid = (M // tm, N // tn, K // tk)

    # Byte-budget the VMEM request explicitly (double-buffered IO + f32 accumulator).
    itemsize = jnp.dtype(a.dtype).itemsize
    block_bytes = 2 * (tm * tk + tk * tn + tm * tn) * itemsize + 4 * tn * 4 + tm * tn * 4
    vmem_limit = int(min(max(block_bytes + (4 << 20), 16 << 20), 32 << 20))

    return pl.pallas_call(
        _conv_bn_matmul_kernel,
        out_shape=jax.ShapeDtypeStruct((M, N), a.dtype),
        grid_spec=pltpu.PrefetchScalarGridSpec(
            num_scalar_prefetch=0,
            grid=grid,
            in_specs=[
                pl.BlockSpec((tm, tk), lambda i, j, k: (i, k)),
                pl.BlockSpec((tk, tn), lambda i, j, k: (k, j)),
                pl.BlockSpec((1, tn), lambda i, j, k: (0, j)),
                pl.BlockSpec((1, tn), lambda i, j, k: (0, j)),
            ],
            out_specs=pl.BlockSpec((tm, tn), lambda i, j, k: (i, j)),
            scratch_shapes=[pltpu.VMEM((tm, tn), jnp.float32)],
        ),
        compiler_params=pltpu.CompilerParams(
            dimension_semantics=("parallel", "parallel", "arbitrary"),
            vmem_limit_bytes=vmem_limit,
        ),
        cost_estimate=pl.CostEstimate(
            flops=2 * M * N * K,
            transcendentals=0,
            bytes_accessed=(M * K + K * N + M * N) * itemsize,
        ),
    )(a, w, scale, shift)


# ----------------------------------------------------------------------------- forward
@functools.partial(
    jax.jit, static_argnames=("stride", "padding", "dilation", "groups", "eps")
)
def conv2d_bn_forward(x, weight, bias, gamma, beta, running_mean, running_var,
                      *, stride=(1, 1), padding=(0, 0), dilation=(1, 1),
                      groups=1, eps=1e-5):
    """JAX/Pallas equivalent of nrlayers.Conv2d.forward (standard path): bn(conv(x)).

    x: (N, CIN, H, W) NCHW, weight: (COUT, CIN, KH, KW), bias: (COUT,) or None,
    gamma/beta/running_mean/running_var: (COUT,) eval-mode BatchNorm parameters.
    Returns (N, COUT, OH, OW) NCHW.
    """
    if groups != 1:
        raise NotImplementedError("groups > 1 not supported")  # TODO(synk): grouped conv

    stride, padding, dilation = _pair(stride), _pair(padding), _pair(dilation)
    cout, cin, kh, kw = weight.shape
    n = x.shape[0]

    # im2col (layout glue) + weight as a (KH*KW*CIN, COUT) matrix (same feature order).
    patches, oh, ow = _im2col(x, kh, kw, stride, padding, dilation)
    wmat = jnp.transpose(weight, (2, 3, 1, 0)).reshape(kh * kw * cin, cout)

    # Fold eval-mode BatchNorm (+ optional conv bias) into a per-channel scale/shift.
    scale = gamma / jnp.sqrt(running_var + eps)
    shift = beta - running_mean * scale
    if bias is not None:
        shift = shift + bias * scale

    M, K = patches.shape
    itemsize = jnp.dtype(patches.dtype).itemsize

    # ---- tile sizing: lane-dense (multiples of 128), byte-budgeted for VMEM ----
    Np = _round_up(cout, 128)
    Kp = _round_up(K, 128)
    tm, tn, tk = _choose_tiles(M, Kp, Np, itemsize)
    Mp = _round_up(M, tm)

    a = patches if (Mp == M and Kp == K) else jnp.pad(patches, ((0, Mp - M), (0, Kp - K)))
    wm = wmat if (Kp == K and Np == cout) else jnp.pad(wmat, ((0, Kp - K), (0, Np - cout)))
    wm = wm.astype(a.dtype)
    scale_p = jnp.pad(scale, (0, Np - cout)).reshape(1, Np).astype(jnp.float32)
    shift_p = jnp.pad(shift, (0, Np - cout)).reshape(1, Np).astype(jnp.float32)

    out2d = _matmul_bn(a, wm, scale_p, shift_p, tm=tm, tn=tn, tk=tk)

    out = out2d[:M, :cout].reshape(n, oh, ow, cout)
    return jnp.transpose(out, (0, 3, 1, 2))  # back to NCHW


# ----------------------------------------------------------------------------- demo
if __name__ == "__main__":
    key = jax.random.PRNGKey(0)
    kx, kw_, kg, kb, km, kv = jax.random.split(key, 6)

    # Module-consistent small shapes: Conv2d(4, 8, kernel_size=3, padding=1, bias=False)
    N, CIN, H, W = 2, 4, 16, 16
    COUT, KH, KW = 8, 3, 3
    stride, padding, dilation = (1, 1), (1, 1), (1, 1)
    eps = 1e-5

    x = jax.random.normal(kx, (N, CIN, H, W), dtype=jnp.float32)
    weight = jax.random.normal(kw_, (COUT, CIN, KH, KW), dtype=jnp.float32) * 0.3
    gamma = jax.random.uniform(kg, (COUT,), minval=0.5, maxval=1.5, dtype=jnp.float32)
    beta = jax.random.normal(kb, (COUT,), dtype=jnp.float32) * 0.1
    running_mean = jax.random.normal(km, (COUT,), dtype=jnp.float32) * 0.1
    running_var = jax.random.uniform(kv, (COUT,), minval=0.5, maxval=1.5, dtype=jnp.float32)

    out = conv2d_bn_forward(
        x, weight, None, gamma, beta, running_mean, running_var,
        stride=stride, padding=padding, dilation=dilation, groups=1, eps=eps)
    out = jax.block_until_ready(out)

    # Plain-JAX reference: high-precision conv + eval-mode BatchNorm.
    ref_conv = jax.lax.conv_general_dilated(
        x, weight, window_strides=stride,
        padding=((padding[0], padding[0]), (padding[1], padding[1])),
        rhs_dilation=dilation,
        dimension_numbers=("NCHW", "OIHW", "NCHW"),
        precision=jax.lax.Precision.HIGHEST)
    inv = gamma / jnp.sqrt(running_var + eps)
    ref = ref_conv * inv[None, :, None, None] + (beta - running_mean * inv)[None, :, None, None]

    assert out.shape == ref.shape
    assert out.dtype == jnp.float32
    # MXU may evaluate f32 matmuls via bf16 passes; tolerance is sized accordingly.
    assert bool(jnp.allclose(out, ref, atol=1e-1, rtol=1e-1)), float(jnp.max(jnp.abs(out - ref)))

    print("KERNEL_OK")
</pallas_src>

<mosaic_0001>
module attributes {stable_mosaic.version = 11 : i64} {
  func.func @_conv_bn_matmul_kernel(%arg0: i32, %arg1: i32, %arg2: i32, %arg3: memref<512x128xf32, #tpu.memory_space<vmem>>, %arg4: memref<128x128xf32, #tpu.memory_space<vmem>>, %arg5: memref<1x128xf32, #tpu.memory_space<vmem>>, %arg6: memref<1x128xf32, #tpu.memory_space<vmem>>, %arg7: memref<512x128xf32, #tpu.memory_space<vmem>>, %arg8: memref<512x128xf32, #tpu.memory_space<vmem>>) attributes {dimension_semantics = [#tpu.dimension_semantics<parallel>, #tpu.dimension_semantics<parallel>, #tpu.dimension_semantics<arbitrary>], iteration_bounds = array<i64: 1, 1, 1>, scalar_prefetch = 0 : i64, scratch_operands = 1 : i64, tpu.core_type = #tpu.core_type<tc>, window_params = [{transform_indices = @transform_0, window_bounds = array<i64: 512, 128>}, {transform_indices = @transform_1, window_bounds = array<i64: 128, 128>}, {transform_indices = @transform_2, window_bounds = array<i64: 1, 128>}, {transform_indices = @transform_3, window_bounds = array<i64: 1, 128>}, {transform_indices = @transform_4, window_bounds = array<i64: 512, 128>}]} {
    %c0_i32 = arith.constant 0 : i32
    %0 = arith.cmpi eq, %arg2, %c0_i32 : i32
    %1 = arith.extui %0 : i1 to i32
    %c0_i32_0 = arith.constant 0 : i32
    %2 = arith.cmpi ne, %1, %c0_i32_0 : i32
    scf.if %2 {
      %cst_10 = arith.constant 0.000000e+00 : f32
      %12 = vector.broadcast %cst_10 : f32 to vector<512x128xf32>
      %c0_11 = arith.constant 0 : index
      %c0_12 = arith.constant 0 : index
      %13 = vector.load %arg8[%c0_11, %c0_12] : memref<512x128xf32, #tpu.memory_space<vmem>>, vector<512x128xf32>
      tpu.vector_store %arg8[%c0_11, %c0_12], %12 {strides = array<i32>} : memref<512x128xf32, #tpu.memory_space<vmem>>, vector<512x128xf32>,
    } else {
    }
    %c0 = arith.constant 0 : index
    %c0_1 = arith.constant 0 : index
    %3 = vector.load %arg8[%c0, %c0_1] : memref<512x128xf32, #tpu.memory_space<vmem>>, vector<512x128xf32>
    %c0_2 = arith.constant 0 : index
    %c0_3 = arith.constant 0 : index
    %4 = vector.load %arg3[%c0_2, %c0_3] : memref<512x128xf32, #tpu.memory_space<vmem>>, vector<512x128xf32>
    %c0_4 = arith.constant 0 : index
    %c0_5 = arith.constant 0 : index
    %5 = vector.load %arg4[%c0_4, %c0_5] : memref<128x128xf32, #tpu.memory_space<vmem>>, vector<128x128xf32>
    %cst = arith.constant dense<0.000000e+00> : vector<512x128xf32>
    %6 = tpu.matmul %4, %5, %cst {dimension_numbers = #tpu.dot_dimension_numbers<[1], [0], [0], [1], [0, 0, 1, 1], [], []>} : vector<512x128xf32>, vector<128x128xf32>, vector<512x128xf32> -> vector<512x128xf32>
    %7 = arith.addf %3, %6 : vector<512x128xf32>
    %c0_6 = arith.constant 0 : index
    %c0_7 = arith.constant 0 : index
    %8 = vector.load %arg8[%c0_6, %c0_7] : memref<512x128xf32, #tpu.memory_space<vmem>>, vector<512x128xf32>
    tpu.vector_store %arg8[%c0_6, %c0_7], %7 {strides = array<i32>} : memref<512x128xf32, #tpu.memory_space<vmem>>, vector<512x128xf32>,
    %c0_i32_8 = arith.constant 0 : i32
    %9 = arith.cmpi eq, %arg2, %c0_i32_8 : i32
    %10 = arith.extui %9 : i1 to i32
    %c0_i32_9 = arith.constant 0 : i32
    %11 = arith.cmpi ne, %10, %c0_i32_9 : i32
    scf.if %11 {
      %c0_10 = arith.constant 0 : index
      %c0_11 = arith.constant 0 : index
      %12 = vector.load %arg8[%c0_10, %c0_11] : memref<512x128xf32, #tpu.memory_space<vmem>>, vector<512x128xf32>
      %c0_12 = arith.constant 0 : index
      %c0_13 = arith.constant 0 : index
      %13 = vector.load %arg5[%c0_12, %c0_13] : memref<1x128xf32, #tpu.memory_space<vmem>>, vector<1x128xf32>
      %14 = vector.broadcast %13 : vector<1x128xf32> to vector<512x128xf32>
      %15 = arith.mulf %12, %14 : vector<512x128xf32>
      %c0_14 = arith.constant 0 : index
      %c0_15 = arith.constant 0 : index
      %16 = vector.load %arg6[%c0_14, %c0_15] : memref<1x128xf32, #tpu.memory_space<vmem>>, vector<1x128xf32>
      %17 = vector.broadcast %16 : vector<1x128xf32> to vector<512x128xf32>
      %18 = arith.addf %15, %17 : vector<512x128xf32>
      %c0_16 = arith.constant 0 : index
      %c0_17 = arith.constant 0 : index
      %19 = vector.load %arg7[%c0_16, %c0_17] : memref<512x128xf32, #tpu.memory_space<vmem>>, vector<512x128xf32>
      tpu.vector_store %arg7[%c0_16, %c0_17], %18 {strides = array<i32>} : memref<512x128xf32, #tpu.memory_space<vmem>>, vector<512x128xf32>,
    } else {
    }
    return
  }
  func.func @transform_0(%arg0: i32, %arg1: i32, %arg2: i32) -> (i32, i32) {
    %c0_i32 = arith.constant 0 : i32
    return %arg0, %arg2 : i32, i32
  }
  func.func @transform_1(%arg0: i32, %arg1: i32, %arg2: i32) -> (i32, i32) {
    %c0_i32 = arith.constant 0 : i32
    return %arg2, %arg1 : i32, i32
  }
  func.func @transform_2(%arg0: i32, %arg1: i32, %arg2: i32) -> (i32, i32) {
    %c0_i32 = arith.constant 0 : i32
    %c0_i32_0 = arith.constant 0 : i32
    return %c0_i32, %arg1 : i32, i32
  }
  func.func @transform_3(%arg0: i32, %arg1: i32, %arg2: i32) -> (i32, i32) {
    %c0_i32 = arith.constant 0 : i32
    %c0_i32_0 = arith.constant 0 : i32
    return %c0_i32, %arg1 : i32, i32
  }
  func.func @transform_4(%arg0: i32, %arg1: i32, %arg2: i32) -> (i32, i32) {
    %c0_i32 = arith.constant 0 : i32
    return %arg0, %arg1 : i32, i32
  }
}

</mosaic_0001>

<llo_original>
// kernel: _matmul_bn.1
$region0: #{_matmul_bn.1}
  #allocation0 [shape = 'u32[]', space=smem, size = 0x4, offset = 0x4, fixed_abs, tag = 'smem constant byte address 0x4 - core index']
  #allocation1 [shape = 'u32[144,128]{1,0:T(1,128)}', space=vmem, size = 0x12000, scoped, tag = 'internal scratch']
  #allocation2 [shape = 'f32[512,128]{1,0:T(8,128)}', space=vmem, size = 0x40000, scoped, tag = 'scratch operand']
  %s0 = inlined_call_operand.hbm [shape: f32[512,128], index: 0, kind: input, shape index: {}]
  %s1 = inlined_call_operand.hbm [shape: f32[128,128], index: 1, kind: input, shape index: {}]
  %s2 = inlined_call_operand.vmem [shape: f32[1,128], index: 2, kind: input, shape index: {}]
  %s3 = inlined_call_operand.vmem [shape: f32[1,128], index: 3, kind: input, shape index: {}]
  %s4 = inlined_call_operand.hbm [shape: f32[512,128], index: 4, kind: output, shape index: {}]
  %s5 = sld [smem:[#allocation0]]
  $region42: #{_matmul_bn.1} parent=0
    _
  %s7 = ssub.s32 1, %s5
  %s8 = scalar_select 0, %s7, %s5
  $region1: #{_matmul_bn.1} parent=0
    #allocation3 [shape = 'u8[262144]{0}', space=vmem, size = 0x40000, scoped, tag = 'input window, operand 0, single buffered']
    #allocation4 [shape = 's32[1]{0}', space=sflag, size = 0x4, scoped, tag = 'scoped memory for _matmul_bn.1']
    #allocation5 [shape = 's32[1]{0}', space=sflag, size = 0x4, scoped, tag = 'scoped memory for _matmul_bn.1']
    #allocation6 [shape = 'u8[65536]{0}', space=vmem, size = 0x10000, scoped, tag = 'input window, operand 1, single buffered']
    #allocation7 [shape = 's32[1]{0}', space=sflag, size = 0x4, scoped, tag = 'scoped memory for _matmul_bn.1']
    #allocation8 [shape = 'u8[262144]{0}', space=vmem, size = 0x40000, scoped, tag = 'output window, operand 0, single buffered']
    %9 = vsyncpa [#allocation4], 0
    %10 = vsyncpa [#allocation7], 0
    %11 = vsyncpa [#allocation5], 0
    // Predicated region
    $region2: #{_matmul_bn.1} parent=1 // pred_check
      _
    $region3: #{_matmul_bn.1} parent=1 // pred_check_branch
      %13 = sbr.rel (0) target = $region5
    $region4: #{_matmul_bn.1} parent=1 // pred_region
      %s15 = ssub.s32 8192, 8192
      %16 = vsyncadd [#allocation4], %s15
      %s17 = sshll.u32 [#allocation3], 4
      %s18 = int_to_ptr.vmem [resolvable:$true] %s17
      %23 = dma.hbm_to_vmem [thread:$0]  %s0, 8192, %s18, [#allocation4], 128, 128, 8
    $region5: #{_matmul_bn.1} parent=1 // pred_fallthru
      _
    // Predicated region
    $region6: #{_matmul_bn.1} parent=1 // pred_check
      _
    $region7: #{_matmul_bn.1} parent=1 // pred_check_branch
      %25 = sbr.rel (0) target = $region9
    $region8: #{_matmul_bn.1} parent=1 // pred_region
      %s27 = ssub.s32 2048, 2048
      %28 = vsyncadd [#allocation7], %s27
      %s29 = sshll.u32 [#allocation6], 4
      %s30 = int_to_ptr.vmem [resolvable:$true] %s29
      %35 = dma.hbm_to_vmem [thread:$0]  %s1, 2048, %s30, [#allocation7], 128, 128, 8
    $region9: #{_matmul_bn.1} parent=1 // pred_fallthru
      _
    // Predicated region
    $region10: #{_matmul_bn.1} parent=1 // pred_check
      _
    $region11: #{_matmul_bn.1} parent=1 // pred_check_branch
      %37 = sbr.rel (0) target = $region13
    $region12: #{_matmul_bn.1} parent=1 // pred_region
      _
    $region13: #{_matmul_bn.1} parent=1 // pred_fallthru
      _
    // Predicated region
    $region14: #{_matmul_bn.1} parent=1 // pred_check
      _
    $region15: #{_matmul_bn.1} parent=1 // pred_check_branch
      %39 = sbr.rel (0) target = $region17
    $region16: #{_matmul_bn.1} parent=1 // pred_region
      _
    $region17: #{_matmul_bn.1} parent=1 // pred_fallthru
      _
    // Predicated region
    $region18: #{_matmul_bn.1} parent=1 // pred_check
      _
    $region19: #{_matmul_bn.1} parent=1 // pred_check_branch
      %41 = sbr.rel (0) target = $region21
    $region20: #{_matmul_bn.1} parent=1 // pred_region
      %42 = dma.done [#allocation4], 8192
    $region21: #{_matmul_bn.1} parent=1 // pred_fallthru
      _
    // Predicated region
    $region22: #{_matmul_bn.1} parent=1 // pred_check
      _
    $region23: #{_matmul_bn.1} parent=1 // pred_check_branch
      %44 = sbr.rel (0) target = $region25
    $region24: #{_matmul_bn.1} parent=1 // pred_region
      %45 = dma.done [#allocation7], 2048
    $region25: #{_matmul_bn.1} parent=1 // pred_fallthru
      _
    %p46 = scmp.eq.s32.totalorder 0, 0
    // Predicated region
    $region26: #{_matmul_bn.1} parent=1 // pred_check
      %p47 = pneg %p46
    $region27: #{_matmul_bn.1} parent=1 // pred_check_branch
      %49 = sbr.rel (%p47) target = $region29
    $region28: #{_matmul_bn.1} parent=1 // pred_region
      %50 = vst [vmem:[#allocation2] sm:$0xff] 0.0
      %51 = vst [vmem:[#allocation2 + $0x8] sm:$0xff] 0.0
      %52 = vst [vmem:[#allocation2 + $0x10] sm:$0xff] 0.0
      %53 = vst [vmem:[#allocation2 + $0x18] sm:$0xff] 0.0
      %54 = vst [vmem:[#allocation2 + $0x20] sm:$0xff] 0.0
      %55 = vst [vmem:[#allocation2 + $0x28] sm:$0xff] 0.0
      %56 = vst [vmem:[#allocation2 + $0x30] sm:$0xff] 0.0
      %57 = vst [vmem:[#allocation2 + $0x38] sm:$0xff] 0.0
      %58 = vst [vmem:[#allocation2 + $0x40] sm:$0xff] 0.0
      %59 = vst [vmem:[#allocation2 + $0x48] sm:$0xff] 0.0
      %60 = vst [vmem:[#allocation2 + $0x50] sm:$0xff] 0.0
      %61 = vst [vmem:[#allocation2 + $0x58] sm:$0xff] 0.0
      %62 = vst [vmem:[#allocation2 + $0x60] sm:$0xff] 0.0
      %63 = vst [vmem:[#allocation2 + $0x68] sm:$0xff] 0.0
      %64 = vst [vmem:[#allocation2 + $0x70] sm:$0xff] 0.0
      %65 = vst [vmem:[#allocation2 + $0x78] sm:$0xff] 0.0
      %66 = vst [vmem:[#allocation2 + $0x80] sm:$0xff] 0.0
      %67 = vst [vmem:[#allocation2 + $0x88] sm:$0xff] 0.0
      %68 = vst [vmem:[#allocation2 + $0x90] sm:$0xff] 0.0
      %69 = vst [vmem:[#allocation2 + $0x98] sm:$0xff] 0.0
      %70 = vst [vmem:[#allocation2 + $0xa0] sm:$0xff] 0.0
      %71 = vst [vmem:[#allocation2 + $0xa8] sm:$0xff] 0.0
      %72 = vst [vmem:[#allocation2 + $0xb0] sm:$0xff] 0.0
      %73 = vst [vmem:[#allocation2 + $0xb8] sm:$0xff] 0.0
      %74 = vst [vmem:[#allocation2 + $0xc0] sm:$0xff] 0.0
      %75 = vst [vmem:[#allocation2 + $0xc8] sm:$0xff] 0.0
      %76 = vst [vmem:[#allocation2 + $0xd0] sm:$0xff] 0.0
      %77 = vst [vmem:[#allocation2 + $0xd8] sm:$0xff] 0.0
      %78 = vst [vmem:[#allocation2 + $0xe0] sm:$0xff] 0.0
      %79 = vst [vmem:[#allocation2 + $0xe8] sm:$0xff] 0.0
      %80 = vst [vmem:[#allocation2 + $0xf0] sm:$0xff] 0.0
      %81 = vst [vmem:[#allocation2 + $0xf8] sm:$0xff] 0.0
      %82 = vst [vmem:[#allocation2 + $0x100] sm:$0xff] 0.0
      %83 = vst [vmem:[#allocation2 + $0x108] sm:$0xff] 0.0
      %84 = vst [vmem:[#allocation2 + $0x110] sm:$0xff] 0.0
      %85 = vst [vmem:[#allocation2 + $0x118] sm:$0xff] 0.0
      %86 = vst [vmem:[#allocation2 + $0x120] sm:$0xff] 0.0
      %87 = vst [vmem:[#allocation2 + $0x128] sm:$0xff] 0.0
      %88 = vst [vmem:[#allocation2 + $0x130] sm:$0xff] 0.0
      %89 = vst [vmem:[#allocation2 + $0x138] sm:$0xff] 0.0
      %90 = vst [vmem:[#allocation2 + $0x140] sm:$0xff] 0.0
      %91 = vst [vmem:[#allocation2 + $0x148] sm:$0xff] 0.0
      %92 = vst [vmem:[#allocation2 + $0x150] sm:$0xff] 0.0
      %93 = vst [vmem:[#allocation2 + $0x158] sm:$0xff] 0.0
      %94 = vst [vmem:[#allocation2 + $0x160] sm:$0xff] 0.0
      %95 = vst [vmem:[#allocation2 + $0x168] sm:$0xff] 0.0
      %96 = vst [vmem:[#allocation2 + $0x170] sm:$0xff] 0.0
      %97 = vst [vmem:[#allocation2 + $0x178] sm:$0xff] 0.0
      %98 = vst [vmem:[#allocation2 + $0x180] sm:$0xff] 0.0
      %99 = vst [vmem:[#allocation2 + $0x188] sm:$0xff] 0.0
      %100 = vst [vmem:[#allocation2 + $0x190] sm:$0xff] 0.0
      %101 = vst [vmem:[#allocation2 + $0x198] sm:$0xff] 0.0
      %102 = vst [vmem:[#allocation2 + $0x1a0] sm:$0xff] 0.0
      %103 = vst [vmem:[#allocation2 + $0x1a8] sm:$0xff] 0.0
      %104 = vst [vmem:[#allocation2 + $0x1b0] sm:$0xff] 0.0
      %105 = vst [vmem:[#allocation2 + $0x1b8] sm:$0xff] 0.0
      %106 = vst [vmem:[#allocation2 + $0x1c0] sm:$0xff] 0.0
      %107 = vst [vmem:[#allocation2 + $0x1c8] sm:$0xff] 0.0
      %108 = vst [vmem:[#allocation2 + $0x1d0] sm:$0xff] 0.0
      %109 = vst [vmem:[#allocation2 + $0x1d8] sm:$0xff] 0.0
      %110 = vst [vmem:[#allocation2 + $0x1e0] sm:$0xff] 0.0
      %111 = vst [vmem:[#allocation2 + $0x1e8] sm:$0xff] 0.0
      %112 = vst [vmem:[#allocation2 + $0x1f0] sm:$0xff] 0.0
      %113 = vst [vmem:[#allocation2 + $0x1f8] sm:$0xff] 0.0
    $region29: #{_matmul_bn.1} parent=1 // pred_fallthru
      _
    %v114 = vld [vmem:[#allocation2] sm:$0xff]
    %v115 = vld [vmem:[#allocation2 + $0x8] sm:$0xff]
    %v116 = vld [vmem:[#allocation2 + $0x10] sm:$0xff]
    %v117 = vld [vmem:[#allocation2 + $0x18] sm:$0xff]
    %v118 = vld [vmem:[#allocation2 + $0x20] sm:$0xff]
    %v119 = vld [vmem:[#allocation2 + $0x28] sm:$0xff]
    %v120 = vld [vmem:[#allocation2 + $0x30] sm:$0xff]
    %v121 = vld [vmem:[#allocation2 + $0x38] sm:$0xff]
    %v122 = vld [vmem:[#allocation2 + $0x40] sm:$0xff]
    %v123 = vld [vmem:[#allocation2 + $0x48] sm:$0xff]
    %v124 = vld [vmem:[#allocation2 + $0x50] sm:$0xff]
    %v125 = vld [vmem:[#allocation2 + $0x58] sm:$0xff]
    %v126 = vld [vmem:[#allocation2 + $0x60] sm:$0xff]
    %v127 = vld [vmem:[#allocation2 + $0x68] sm:$0xff]
    %v128 = vld [vmem:[#allocation2 + $0x70] sm:$0xff]
    %v129 = vld [vmem:[#allocation2 + $0x78] sm:$0xff]
    %v130 = vld [vmem:[#allocation2 + $0x80] sm:$0xff]
    %v131 = vld [vmem:[#allocation2 + $0x88] sm:$0xff]
    %v132 = vld [vmem:[#allocation2 + $0x90] sm:$0xff]
    %v133 = vld [vmem:[#allocation2 + $0x98] sm:$0xff]
    %v134 = vld [vmem:[#allocation2 + $0xa0] sm:$0xff]
    %v135 = vld [vmem:[#allocation2 + $0xa8] sm:$0xff]
    %v136 = vld [vmem:[#allocation2 + $0xb0] sm:$0xff]
    %v137 = vld [vmem:[#allocation2 + $0xb8] sm:$0xff]
    %v138 = vld [vmem:[#allocation2 + $0xc0] sm:$0xff]
    %v139 = vld [vmem:[#allocation2 + $0xc8] sm:$0xff]
    %v140 = vld [vmem:[#allocation2 + $0xd0] sm:$0xff]
    %v141 = vld [vmem:[#allocation2 + $0xd8] sm:$0xff]
    %v142 = vld [vmem:[#allocation2 + $0xe0] sm:$0xff]
    %v143 = vld [vmem:[#allocation2 + $0xe8] sm:$0xff]
    %v144 = vld [vmem:[#allocation2 + $0xf0] sm:$0xff]
    %v145 = vld [vmem:[#allocation2 + $0xf8] sm:$0xff]
    %v146 = vld [vmem:[#allocation2 + $0x100] sm:$0xff]
    %v147 = vld [vmem:[#allocation2 + $0x108] sm:$0xff]
    %v148 = vld [vmem:[#allocation2 + $0x110] sm:$0xff]
    %v149 = vld [vmem:[#allocation2 + $0x118] sm:$0xff]
    %v150 = vld [vmem:[#allocation2 + $0x120] sm:$0xff]
    %v151 = vld [vmem:[#allocation2 + $0x128] sm:$0xff]
    %v152 = vld [vmem:[#allocation2 + $0x130] sm:$0xff]
    %v153 = vld [vmem:[#allocation2 + $0x138] sm:$0xff]
    %v154 = vld [vmem:[#allocation2 + $0x140] sm:$0xff]
    %v155 = vld [vmem:[#allocation2 + $0x148] sm:$0xff]
    %v156 = vld [vmem:[#allocation2 + $0x150] sm:$0xff]
    %v157 = vld [vmem:[#allocation2 + $0x158] sm:$0xff]
    %v158 = vld [vmem:[#allocation2 + $0x160] sm:$0xff]
    %v159 = vld [vmem:[#allocation2 + $0x168] sm:$0xff]
    %v160 = vld [vmem:[#allocation2 + $0x170] sm:$0xff]
    %v161 = vld [vmem:[#allocation2 + $0x178] sm:$0xff]
    %v162 = vld [vmem:[#allocation2 + $0x180] sm:$0xff]
    %v163 = vld [vmem:[#allocation2 + $0x188] sm:$0xff]
    %v164 = vld [vmem:[#allocation2 + $0x190] sm:$0xff]
    %v165 = vld [vmem:[#allocation2 + $0x198] sm:$0xff]
    %v166 = vld [vmem:[#allocation2 + $0x1a0] sm:$0xff]
    %v167 = vld [vmem:[#allocation2 + $0x1a8] sm:$0xff]
    %v168 = vld [vmem:[#allocation2 + $0x1b0] sm:$0xff]
    %v169 = vld [vmem:[#allocation2 + $0x1b8] sm:$0xff]
    %v170 = vld [vmem:[#allocation2 + $0x1c0] sm:$0xff]
    %v171 = vld [vmem:[#allocation2 + $0x1c8] sm:$0xff]
    %v172 = vld [vmem:[#allocation2 + $0x1d0] sm:$0xff]
    %v173 = vld [vmem:[#allocation2 + $0x1d8] sm:$0xff]
    %v174 = vld [vmem:[#allocation2 + $0x1e0] sm:$0xff]
    %v175 = vld [vmem:[#allocation2 + $0x1e8] sm:$0xff]
    %v176 = vld [vmem:[#allocation2 + $0x1f0] sm:$0xff]
    %v177 = vld [vmem:[#allocation2 + $0x1f8] sm:$0xff]
    %v178 = vld [vmem:[#allocation3] sm:$0xff]
    %v179 = vld [vmem:[#allocation3 + $0x8] sm:$0xff]
    %v180 = vld [vmem:[#allocation3 + $0x10] sm:$0xff]
    %v181 = vld [vmem:[#allocation3 + $0x18] sm:$0xff]
    %v182 = vld [vmem:[#allocation3 + $0x20] sm:$0xff]
    %v183 = vld [vmem:[#allocation3 + $0x28] sm:$0xff]
    %v184 = vld [vmem:[#allocation3 + $0x30] sm:$0xff]
    %v185 = vld [vmem:[#allocation3 + $0x38] sm:$0xff]
    %v186 = vld [vmem:[#allocation3 + $0x40] sm:$0xff]
    %v187 = vld [vmem:[#allocation3 + $0x48] sm:$0xff]
    %v188 = vld [vmem:[#allocation3 + $0x50] sm:$0xff]
    %v189 = vld [vmem:[#allocation3 + $0x58] sm:$0xff]
    %v190 = vld [vmem:[#allocation3 + $0x60] sm:$0xff]
    %v191 = vld [vmem:[#allocation3 + $0x68] sm:$0xff]
    %v192 = vld [vmem:[#allocation3 + $0x70] sm:$0xff]
    %v193 = vld [vmem:[#allocation3 + $0x78] sm:$0xff]
    %v194 = vld [vmem:[#allocation3 + $0x80] sm:$0xff]
    %v195 = vld [vmem:[#allocation3 + $0x88] sm:$0xff]
    %v196 = vld [vmem:[#allocation3 + $0x90] sm:$0xff]
    %v197 = vld [vmem:[#allocation3 + $0x98] sm:$0xff]
    %v198 = vld [vmem:[#allocation3 + $0xa0] sm:$0xff]
    %v199 = vld [vmem:[#allocation3 + $0xa8] sm:$0xff]
    %v200 = vld [vmem:[#allocation3 + $0xb0] sm:$0xff]
    %v201 = vld [vmem:[#allocation3 + $0xb8] sm:$0xff]
    %v202 = vld [vmem:[#allocation3 + $0xc0] sm:$0xff]
    %v203 = vld [vmem:[#allocation3 + $0xc8] sm:$0xff]
    %v204 = vld [vmem:[#allocation3 + $0xd0] sm:$0xff]
    %v205 = vld [vmem:[#allocation3 + $0xd8] sm:$0xff]
    %v206 = vld [vmem:[#allocation3 + $0xe0] sm:$0xff]
    %v207 = vld [vmem:[#allocation3 + $0xe8] sm:$0xff]
    %v208 = vld [vmem:[#allocation3 + $0xf0] sm:$0xff]
    %v209 = vld [vmem:[#allocation3 + $0xf8] sm:$0xff]
    %v210 = vld [vmem:[#allocation3 + $0x100] sm:$0xff]
    %v211 = vld [vmem:[#allocation3 + $0x108] sm:$0xff]
    %v212 = vld [vmem:[#allocation3 + $0x110] sm:$0xff]
    %v213 = vld [vmem:[#allocation3 + $0x118] sm:$0xff]
    %v214 = vld [vmem:[#allocation3 + $0x120] sm:$0xff]
    %v215 = vld [vmem:[#allocation3 + $0x128] sm:$0xff]
    %v216 = vld [vmem:[#allocation3 + $0x130] sm:$0xff]
    %v217 = vld [vmem:[#allocation3 + $0x138] sm:$0xff]
    %v218 = vld [vmem:[#allocation3 + $0x140] sm:$0xff]
    %v219 = vld [vmem:[#allocation3 + $0x148] sm:$0xff]
    %v220 = vld [vmem:[#allocation3 + $0x150] sm:$0xff]
    %v221 = vld [vmem:[#allocation3 + $0x158] sm:$0xff]
    %v222 = vld [vmem:[#allocation3 + $0x160] sm:$0xff]
    %v223 = vld [vmem:[#allocation3 + $0x168] sm:$0xff]
    %v224 = vld [vmem:[#allocation3 + $0x170] sm:$0xff]
    %v225 = vld [vmem:[#allocation3 + $0x178] sm:$0xff]
    %v226 = vld [vmem:[#allocation3 + $0x180] sm:$0xff]
    %v227 = vld [vmem:[#allocation3 + $0x188] sm:$0xff]
    %v228 = vld [vmem:[#allocation3 + $0x190] sm:$0xff]
    %v229 = vld [vmem:[#allocation3 + $0x198] sm:$0xff]
    %v230 = vld [vmem:[#allocation3 + $0x1a0] sm:$0xff]
    %v231 = vld [vmem:[#allocation3 + $0x1a8] sm:$0xff]
    %v232 = vld [vmem:[#allocation3 + $0x1b0] sm:$0xff]
    %v233 = vld [vmem:[#allocation3 + $0x1b8] sm:$0xff]
    %v234 = vld [vmem:[#allocation3 + $0x1c0] sm:$0xff]
    %v235 = vld [vmem:[#allocation3 + $0x1c8] sm:$0xff]
    %v236 = vld [vmem:[#allocation3 + $0x1d0] sm:$0xff]
    %v237 = vld [vmem:[#allocation3 + $0x1d8] sm:$0xff]
    %v238 = vld [vmem:[#allocation3 + $0x1e0] sm:$0xff]
    %v239 = vld [vmem:[#allocation3 + $0x1e8] sm:$0xff]
    %v240 = vld [vmem:[#allocation3 + $0x1f0] sm:$0xff]
    %v241 = vld [vmem:[#allocation3 + $0x1f8] sm:$0xff]
    %v242 = vld [vmem:[#allocation6] sm:$0xff]
    %v243 = vld [vmem:[#allocation6 + $0x8] sm:$0xff]
    %v244 = vld [vmem:[#allocation6 + $0x10] sm:$0xff]
    %v245 = vld [vmem:[#allocation6 + $0x18] sm:$0xff]
    %v246 = vld [vmem:[#allocation6 + $0x20] sm:$0xff]
    %v247 = vld [vmem:[#allocation6 + $0x28] sm:$0xff]
    %v248 = vld [vmem:[#allocation6 + $0x30] sm:$0xff]
    %v249 = vld [vmem:[#allocation6 + $0x38] sm:$0xff]
    %v250 = vld [vmem:[#allocation6 + $0x40] sm:$0xff]
    %v251 = vld [vmem:[#allocation6 + $0x48] sm:$0xff]
    %v252 = vld [vmem:[#allocation6 + $0x50] sm:$0xff]
    %v253 = vld [vmem:[#allocation6 + $0x58] sm:$0xff]
    %v254 = vld [vmem:[#allocation6 + $0x60] sm:$0xff]
    %v255 = vld [vmem:[#allocation6 + $0x68] sm:$0xff]
    %v256 = vld [vmem:[#allocation6 + $0x70] sm:$0xff]
    %v257 = vld [vmem:[#allocation6 + $0x78] sm:$0xff]
    %258 = vmatprep.subr.mxu0 0.0
    %259 = vmatpush1.msra.mxu0 %v257
    %260 = vmatprep.subr.mxu0 0.0
    %261 = vmatpush1.msra.mxu0 %v256
    %262 = vmatprep.subr.mxu0 0.0
    %263 = vmatpush1.msra.mxu0 %v255
    %264 = vmatprep.subr.mxu0 0.0
    %265 = vmatpush1.msra.mxu0 %v254
    %266 = vmatprep.subr.mxu0 0.0
    %267 = vmatpush1.msra.mxu0 %v253
    %268 = vmatprep.subr.mxu0 0.0
    %269 = vmatpush1.msra.mxu0 %v252
    %270 = vmatprep.subr.mxu0 0.0
    %271 = vmatpush1.msra.mxu0 %v251
    %272 = vmatprep.subr.mxu0 0.0
    %273 = vmatpush1.msra.mxu0 %v250
    %274 = vmatprep.subr.mxu0 0.0
    %275 = vmatpush1.msra.mxu0 %v249
    %276 = vmatprep.subr.mxu0 0.0
    %277 = vmatpush1.msra.mxu0 %v248
    %278 = vmatprep.subr.mxu0 0.0
    %279 = vmatpush1.msra.mxu0 %v247
    %280 = vmatprep.subr.mxu0 0.0
    %281 = vmatpush1.msra.mxu0 %v246
    %282 = vmatprep.subr.mxu0 0.0
    %283 = vmatpush1.msra.mxu0 %v245
    %284 = vmatprep.subr.mxu0 0.0
    %285 = vmatpush1.msra.mxu0 %v244
    %286 = vmatprep.subr.mxu0 0.0
    %287 = vmatpush1.msra.mxu0 %v243
    %288 = vmatprep.subr.mxu0 0.0
    %289 = vmatpush1.msra.mxu0 %v242
    %290 = vmatprep.subr.mxu0 0.0
    %291 = vmatpush2.msra.mxu0 0.0
    %292 = vmatprep.subr.mxu0 0.0
    %293 = vmatpush2.msra.mxu0 0.0
    %294 = vmatprep.subr.mxu0 0.0
    %295 = vmatpush2.msra.mxu0 0.0
    %296 = vmatprep.subr.mxu0 0.0
    %297 = vmatpush2.msra.mxu0 0.0
    %298 = vmatprep.subr.mxu0 0.0
    %299 = vmatpush2.msra.mxu0 0.0
    %300 = vmatprep.subr.mxu0 0.0
    %301 = vmatpush2.msra.mxu0 0.0
    %302 = vmatprep.subr.mxu0 0.0
    %303 = vmatpush2.msra.mxu0 0.0
    %304 = vmatprep.subr.mxu0 0.0
    %305 = vmatpush2.msra.mxu0 0.0
    %306 = vmatprep.subr.mxu0 0.0
    %307 = vmatpush2.msra.mxu0 0.0
    %308 = vmatprep.subr.mxu0 0.0
    %309 = vmatpush2.msra.mxu0 0.0
    %310 = vmatprep.subr.mxu0 0.0
    %311 = vmatpush2.msra.mxu0 0.0
    %312 = vmatprep.subr.mxu0 0.0
    %313 = vmatpush2.msra.mxu0 0.0
    %314 = vmatprep.subr.mxu0 0.0
    %315 = vmatpush2.msra.mxu0 0.0
    %316 = vmatprep.subr.mxu0 0.0
    %317 = vmatpush2.msra.mxu0 0.0
    %318 = vmatprep.subr.mxu0 0.0
    %319 = vmatpush2.msra.mxu0 0.0
    %320 = vmatprep.subr.mxu0 0.0
    %321 = vmatpush2.msra.mxu0 0.0
    %322 = vmatprep.mubr.f32.mxu0 0.0
    %323 = vmatmul.mubr.f32.gmra.mxu0 %v178
    %v324 = vpop.f32.mrf.mxu0
    %v325 = vadd.f32 0.0, %v324
    %v326 = vpop.f32.mrf.mxu0
    %327 = vmatprep.mubr.f32.mxu0 0.0
    %328 = vmatmul.mubr.f32.gmra.mxu0 %v179
    %v329 = vpop.f32.mrf.mxu0
    %v330 = vadd.f32 0.0, %v329
    %v331 = vpop.f32.mrf.mxu0
    %332 = vmatprep.mubr.f32.mxu0 0.0
    %333 = vmatmul.mubr.f32.gmra.mxu0 %v180
    %v334 = vpop.f32.mrf.mxu0
    %v335 = vadd.f32 0.0, %v334
    %v336 = vpop.f32.mrf.mxu0
    %337 = vmatprep.mubr.f32.mxu0 0.0
    %338 = vmatmul.mubr.f32.gmra.mxu0 %v181
    %v339 = vpop.f32.mrf.mxu0
    %v340 = vadd.f32 0.0, %v339
    %v341 = vpop.f32.mrf.mxu0
    %342 = vmatprep.mubr.f32.mxu0 0.0
    %343 = vmatmul.mubr.f32.gmra.mxu0 %v182
    %v344 = vpop.f32.mrf.mxu0
    %v345 = vadd.f32 0.0, %v344
    %v346 = vpop.f32.mrf.mxu0
    %347 = vmatprep.mubr.f32.mxu0 0.0
    %348 = vmatmul.mubr.f32.gmra.mxu0 %v183
    %v349 = vpop.f32.mrf.mxu0
    %v350 = vadd.f32 0.0, %v349
    %v351 = vpop.f32.mrf.mxu0
    %352 = vmatprep.mubr.f32.mxu0 0.0
    %353 = vmatmul.mubr.f32.gmra.mxu0 %v184
    %v354 = vpop.f32.mrf.mxu0
    %v355 = vadd.f32 0.0, %v354
    %v356 = vpop.f32.mrf.mxu0
    %357 = vmatprep.mubr.f32.mxu0 0.0
    %358 = vmatmul.mubr.f32.gmra.mxu0 %v185
    %v359 = vpop.f32.mrf.mxu0
    %v360 = vadd.f32 0.0, %v359
    %v361 = vpop.f32.mrf.mxu0
    %362 = vmatprep.mubr.f32.mxu0 0.0
    %363 = vmatmul.mubr.f32.gmra.mxu0 %v186
    %v364 = vpop.f32.mrf.mxu0
    %v365 = vadd.f32 0.0, %v364
    %v366 = vpop.f32.mrf.mxu0
    %367 = vmatprep.mubr.f32.mxu0 0.0
    %368 = vmatmul.mubr.f32.gmra.mxu0 %v187
    %v369 = vpop.f32.mrf.mxu0
    %v370 = vadd.f32 0.0, %v369
    %v371 = vpop.f32.mrf.mxu0
    %372 = vmatprep.mubr.f32.mxu0 0.0
    %373 = vmatmul.mubr.f32.gmra.mxu0 %v188
    %v374 = vpop.f32.mrf.mxu0
    %v375 = vadd.f32 0.0, %v374
    %v376 = vpop.f32.mrf.mxu0
    %377 = vmatprep.mubr.f32.mxu0 0.0
    %378 = vmatmul.mubr.f32.gmra.mxu0 %v189
    %v379 = vpop.f32.mrf.mxu0
    %v380 = vadd.f32 0.0, %v379
    %v381 = vpop.f32.mrf.mxu0
    %382 = vmatprep.mubr.f32.mxu0 0.0
    %383 = vmatmul.mubr.f32.gmra.mxu0 %v190
    %v384 = vpop.f32.mrf.mxu0
    %v385 = vadd.f32 0.0, %v384
    %v386 = vpop.f32.mrf.mxu0
    %387 = vmatprep.mubr.f32.mxu0 0.0
    %388 = vmatmul.mubr.f32.gmra.mxu0 %v191
    %v389 = vpop.f32.mrf.mxu0
    %v390 = vadd.f32 0.0, %v389
    %v391 = vpop.f32.mrf.mxu0
    %392 = vmatprep.mubr.f32.mxu0 0.0
    %393 = vmatmul.mubr.f32.gmra.mxu0 %v192
    %v394 = vpop.f32.mrf.mxu0
    %v395 = vadd.f32 0.0, %v394
    %v396 = vpop.f32.mrf.mxu0
    %397 = vmatprep.mubr.f32.mxu0 0.0
    %398 = vmatmul.mubr.f32.gmra.mxu0 %v193
    %v399 = vpop.f32.mrf.mxu0
    %v400 = vadd.f32 0.0, %v399
    %v401 = vpop.f32.mrf.mxu0
    %402 = vmatprep.mubr.f32.mxu0 0.0
    %403 = vmatmul.mubr.f32.gmra.mxu0 %v194
    %v404 = vpop.f32.mrf.mxu0
    %v405 = vadd.f32 0.0, %v404
    %v406 = vpop.f32.mrf.mxu0
    %407 = vmatprep.mubr.f32.mxu0 0.0
    %408 = vmatmul.mubr.f32.gmra.mxu0 %v195
    %v409 = vpop.f32.mrf.mxu0
    %v410 = vadd.f32 0.0, %v409
    %v411 = vpop.f32.mrf.mxu0
    %412 = vmatprep.mubr.f32.mxu0 0.0
    %413 = vmatmul.mubr.f32.gmra.mxu0 %v196
    %v414 = vpop.f32.mrf.mxu0
    %v415 = vadd.f32 0.0, %v414
    %v416 = vpop.f32.mrf.mxu0
    %417 = vmatprep.mubr.f32.mxu0 0.0
    %418 = vmatmul.mubr.f32.gmra.mxu0 %v197
    %v419 = vpop.f32.mrf.mxu0
    %v420 = vadd.f32 0.0, %v419
    %v421 = vpop.f32.mrf.mxu0
    %422 = vmatprep.mubr.f32.mxu0 0.0
    %423 = vmatmul.mubr.f32.gmra.mxu0 %v198
    %v424 = vpop.f32.mrf.mxu0
    %v425 = vadd.f32 0.0, %v424
    %v426 = vpop.f32.mrf.mxu0
    %427 = vmatprep.mubr.f32.mxu0 0.0
    %428 = vmatmul.mubr.f32.gmra.mxu0 %v199
    %v429 = vpop.f32.mrf.mxu0
    %v430 = vadd.f32 0.0, %v429
    %v431 = vpop.f32.mrf.mxu0
    %432 = vmatprep.mubr.f32.mxu0 0.0
    %433 = vmatmul.mubr.f32.gmra.mxu0 %v200
    %v434 = vpop.f32.mrf.mxu0
    %v435 = vadd.f32 0.0, %v434
    %v436 = vpop.f32.mrf.mxu0
    %437 = vmatprep.mubr.f32.mxu0 0.0
    %438 = vmatmul.mubr.f32.gmra.mxu0 %v201
    %v439 = vpop.f32.mrf.mxu0
    %v440 = vadd.f32 0.0, %v439
    %v441 = vpop.f32.mrf.mxu0
    %442 = vmatprep.mubr.f32.mxu0 0.0
    %443 = vmatmul.mubr.f32.gmra.mxu0 %v202
    %v444 = vpop.f32.mrf.mxu0
    %v445 = vadd.f32 0.0, %v444
    %v446 = vpop.f32.mrf.mxu0
    %447 = vmatprep.mubr.f32.mxu0 0.0
    %448 = vmatmul.mubr.f32.gmra.mxu0 %v203
    %v449 = vpop.f32.mrf.mxu0
    %v450 = vadd.f32 0.0, %v449
    %v451 = vpop.f32.mrf.mxu0
    %452 = vmatprep.mubr.f32.mxu0 0.0
    %453 = vmatmul.mubr.f32.gmra.mxu0 %v204
    %v454 = vpop.f32.mrf.mxu0
    %v455 = vadd.f32 0.0, %v454
    %v456 = vpop.f32.mrf.mxu0
    %457 = vmatprep.mubr.f32.mxu0 0.0
    %458 = vmatmul.mubr.f32.gmra.mxu0 %v205
    %v459 = vpop.f32.mrf.mxu0
    %v460 = vadd.f32 0.0, %v459
    %v461 = vpop.f32.mrf.mxu0
    %462 = vmatprep.mubr.f32.mxu0 0.0
    %463 = vmatmul.mubr.f32.gmra.mxu0 %v206
    %v464 = vpop.f32.mrf.mxu0
    %v465 = vadd.f32 0.0, %v464
    %v466 = vpop.f32.mrf.mxu0
    %467 = vmatprep.mubr.f32.mxu0 0.0
    %468 = vmatmul.mubr.f32.gmra.mxu0 %v207
    %v469 = vpop.f32.mrf.mxu0
    %v470 = vadd.f32 0.0, %v469
    %v471 = vpop.f32.mrf.mxu0
    %472 = vmatprep.mubr.f32.mxu0 0.0
    %473 = vmatmul.mubr.f32.gmra.mxu0 %v208
    %v474 = vpop.f32.mrf.mxu0
    %v475 = vadd.f32 0.0, %v474
    %v476 = vpop.f32.mrf.mxu0
    %477 = vmatprep.mubr.f32.mxu0 0.0
    %478 = vmatmul.mubr.f32.gmra.mxu0 %v209
    %v479 = vpop.f32.mrf.mxu0
    %v480 = vadd.f32 0.0, %v479
    %v481 = vpop.f32.mrf.mxu0
    %482 = vmatprep.mubr.f32.mxu0 0.0
    %483 = vmatmul.mubr.f32.gmra.mxu0 %v210
    %v484 = vpop.f32.mrf.mxu0
    %v485 = vadd.f32 0.0, %v484
    %v486 = vpop.f32.mrf.mxu0
    %487 = vmatprep.mubr.f32.mxu0 0.0
    %488 = vmatmul.mubr.f32.gmra.mxu0 %v211
    %v489 = vpop.f32.mrf.mxu0
    %v490 = vadd.f32 0.0, %v489
    %v491 = vpop.f32.mrf.mxu0
    %492 = vmatprep.mubr.f32.mxu0 0.0
    %493 = vmatmul.mubr.f32.gmra.mxu0 %v212
    %v494 = vpop.f32.mrf.mxu0
    %v495 = vadd.f32 0.0, %v494
    %v496 = vpop.f32.mrf.mxu0
    %497 = vmatprep.mubr.f32.mxu0 0.0
    %498 = vmatmul.mubr.f32.gmra.mxu0 %v213
    %v499 = vpop.f32.mrf.mxu0
    %v500 = vadd.f32 0.0, %v499
    %v501 = vpop.f32.mrf.mxu0
    %502 = vmatprep.mubr.f32.mxu0 0.0
    %503 = vmatmul.mubr.f32.gmra.mxu0 %v214
    %v504 = vpop.f32.mrf.mxu0
    %v505 = vadd.f32 0.0, %v504
    %v506 = vpop.f32.mrf.mxu0
    %507 = vmatprep.mubr.f32.mxu0 0.0
    %508 = vmatmul.mubr.f32.gmra.mxu0 %v215
    %v509 = vpop.f32.mrf.mxu0
    %v510 = vadd.f32 0.0, %v509
    %v511 = vpop.f32.mrf.mxu0
    %512 = vmatprep.mubr.f32.mxu0 0.0
    %513 = vmatmul.mubr.f32.gmra.mxu0 %v216
    %v514 = vpop.f32.mrf.mxu0
    %v515 = vadd.f32 0.0, %v514
    %v516 = vpop.f32.mrf.mxu0
    %517 = vmatprep.mubr.f32.mxu0 0.0
    %518 = vmatmul.mubr.f32.gmra.mxu0 %v217
    %v519 = vpop.f32.mrf.mxu0
    %v520 = vadd.f32 0.0, %v519
    %v521 = vpop.f32.mrf.mxu0
    %522 = vmatprep.mubr.f32.mxu0 0.0
    %523 = vmatmul.mubr.f32.gmra.mxu0 %v218
    %v524 = vpop.f32.mrf.mxu0
    %v525 = vadd.f32 0.0, %v524
    %v526 = vpop.f32.mrf.mxu0
    %527 = vmatprep.mubr.f32.mxu0 0.0
    %528 = vmatmul.mubr.f32.gmra.mxu0 %v219
    %v529 = vpop.f32.mrf.mxu0
    %v530 = vadd.f32 0.0, %v529
    %v531 = vpop.f32.mrf.mxu0
    %532 = vmatprep.mubr.f32.mxu0 0.0
    %533 = vmatmul.mubr.f32.gmra.mxu0 %v220
    %v534 = vpop.f32.mrf.mxu0
    %v535 = vadd.f32 0.0, %v534
    %v536 = vpop.f32.mrf.mxu0
    %537 = vmatprep.mubr.f32.mxu0 0.0
    %538 = vmatmul.mubr.f32.gmra.mxu0 %v221
    %v539 = vpop.f32.mrf.mxu0
    %v540 = vadd.f32 0.0, %v539
    %v541 = vpop.f32.mrf.mxu0
    %542 = vmatprep.mubr.f32.mxu0 0.0
    %543 = vmatmul.mubr.f32.gmra.mxu0 %v222
    %v544 = vpop.f32.mrf.mxu0
    %v545 = vadd.f32 0.0, %v544
    %v546 = vpop.f32.mrf.mxu0
    %547 = vmatprep.mubr.f32.mxu0 0.0
    %548 = vmatmul.mubr.f32.gmra.mxu0 %v223
    %v549 = vpop.f32.mrf.mxu0
    %v550 = vadd.f32 0.0, %v549
    %v551 = vpop.f32.mrf.mxu0
    %552 = vmatprep.mubr.f32.mxu0 0.0
    %553 = vmatmul.mubr.f32.gmra.mxu0 %v224
    %v554 = vpop.f32.mrf.mxu0
    %v555 = vadd.f32 0.0, %v554
    %v556 = vpop.f32.mrf.mxu0
    %557 = vmatprep.mubr.f32.mxu0 0.0
    %558 = vmatmul.mubr.f32.gmra.mxu0 %v225
    %v559 = vpop.f32.mrf.mxu0
    %v560 = vadd.f32 0.0, %v559
    %v561 = vpop.f32.mrf.mxu0
    %562 = vmatprep.mubr.f32.mxu0 0.0
    %563 = vmatmul.mubr.f32.gmra.mxu0 %v226
    %v564 = vpop.f32.mrf.mxu0
    %v565 = vadd.f32 0.0, %v564
    %v566 = vpop.f32.mrf.mxu0
    %567 = vmatprep.mubr.f32.mxu0 0.0
    %568 = vmatmul.mubr.f32.gmra.mxu0 %v227
    %v569 = vpop.f32.mrf.mxu0
    %v570 = vadd.f32 0.0, %v569
    %v571 = vpop.f32.mrf.mxu0
    %572 = vmatprep.mubr.f32.mxu0 0.0
    %573 = vmatmul.mubr.f32.gmra.mxu0 %v228
    %v574 = vpop.f32.mrf.mxu0
    %v575 = vadd.f32 0.0, %v574
    %v576 = vpop.f32.mrf.mxu0
    %577 = vmatprep.mubr.f32.mxu0 0.0
    %578 = vmatmul.mubr.f32.gmra.mxu0 %v229
    %v579 = vpop.f32.mrf.mxu0
    %v580 = vadd.f32 0.0, %v579
    %v581 = vpop.f32.mrf.mxu0
    %582 = vmatprep.mubr.f32.mxu0 0.0
    %583 = vmatmul.mubr.f32.gmra.mxu0 %v230
    %v584 = vpop.f32.mrf.mxu0
    %v585 = vadd.f32 0.0, %v584
    %v586 = vpop.f32.mrf.mxu0
    %587 = vmatprep.mubr.f32.mxu0 0.0
    %588 = vmatmul.mubr.f32.gmra.mxu0 %v231
    %v589 = vpop.f32.mrf.mxu0
    %v590 = vadd.f32 0.0, %v589
    %v591 = vpop.f32.mrf.mxu0
    %592 = vmatprep.mubr.f32.mxu0 0.0
    %593 = vmatmul.mubr.f32.gmra.mxu0 %v232
    %v594 = vpop.f32.mrf.mxu0
    %v595 = vadd.f32 0.0, %v594
    %v596 = vpop.f32.mrf.mxu0
    %597 = vmatprep.mubr.f32.mxu0 0.0
    %598 = vmatmul.mubr.f32.gmra.mxu0 %v233
    %v599 = vpop.f32.mrf.mxu0
    %v600 = vadd.f32 0.0, %v599
    %v601 = vpop.f32.mrf.mxu0
    %602 = vmatprep.mubr.f32.mxu0 0.0
    %603 = vmatmul.mubr.f32.gmra.mxu0 %v234
    %v604 = vpop.f32.mrf.mxu0
    %v605 = vadd.f32 0.0, %v604
    %v606 = vpop.f32.mrf.mxu0
    %607 = vmatprep.mubr.f32.mxu0 0.0
    %608 = vmatmul.mubr.f32.gmra.mxu0 %v235
    %v609 = vpop.f32.mrf.mxu0
    %v610 = vadd.f32 0.0, %v609
    %v611 = vpop.f32.mrf.mxu0
    %612 = vmatprep.mubr.f32.mxu0 0.0
    %613 = vmatmul.mubr.f32.gmra.mxu0 %v236
    %v614 = vpop.f32.mrf.mxu0
    %v615 = vadd.f32 0.0, %v614
    %v616 = vpop.f32.mrf.mxu0
    %617 = vmatprep.mubr.f32.mxu0 0.0
    %618 = vmatmul.mubr.f32.gmra.mxu0 %v237
    %v619 = vpop.f32.mrf.mxu0
    %v620 = vadd.f32 0.0, %v619
    %v621 = vpop.f32.mrf.mxu0
    %622 = vmatprep.mubr.f32.mxu0 0.0
    %623 = vmatmul.mubr.f32.gmra.mxu0 %v238
    %v624 = vpop.f32.mrf.mxu0
    %v625 = vadd.f32 0.0, %v624
    %v626 = vpop.f32.mrf.mxu0
    %627 = vmatprep.mubr.f32.mxu0 0.0
    %628 = vmatmul.mubr.f32.gmra.mxu0 %v239
    %v629 = vpop.f32.mrf.mxu0
    %v630 = vadd.f32 0.0, %v629
    %v631 = vpop.f32.mrf.mxu0
    %632 = vmatprep.mubr.f32.mxu0 0.0
    %633 = vmatmul.mubr.f32.gmra.mxu0 %v240
    %v634 = vpop.f32.mrf.mxu0
    %v635 = vadd.f32 0.0, %v634
    %v636 = vpop.f32.mrf.mxu0
    %637 = vmatprep.mubr.f32.mxu0 0.0
    %638 = vmatmul.mubr.f32.gmra.mxu0 %v241
    %v639 = vpop.f32.mrf.mxu0
    %v640 = vadd.f32 0.0, %v639
    %v641 = vpop.f32.mrf.mxu0
    %642 = vdwg.mxu0
    %v643 = vadd.f32 %v114, %v325
    %v644 = vadd.f32 %v115, %v330
    %v645 = vadd.f32 %v116, %v335
    %v646 = vadd.f32 %v117, %v340
    %v647 = vadd.f32 %v118, %v345
    %v648 = vadd.f32 %v119, %v350
    %v649 = vadd.f32 %v120, %v355
    %v650 = vadd.f32 %v121, %v360
    %v651 = vadd.f32 %v122, %v365
    %v652 = vadd.f32 %v123, %v370
    %v653 = vadd.f32 %v124, %v375
    %v654 = vadd.f32 %v125, %v380
    %v655 = vadd.f32 %v126, %v385
    %v656 = vadd.f32 %v127, %v390
    %v657 = vadd.f32 %v128, %v395
    %v658 = vadd.f32 %v129, %v400
    %v659 = vadd.f32 %v130, %v405
    %v660 = vadd.f32 %v131, %v410
    %v661 = vadd.f32 %v132, %v415
    %v662 = vadd.f32 %v133, %v420
    %v663 = vadd.f32 %v134, %v425
    %v664 = vadd.f32 %v135, %v430
    %v665 = vadd.f32 %v136, %v435
    %v666 = vadd.f32 %v137, %v440
    %v667 = vadd.f32 %v138, %v445
    %v668 = vadd.f32 %v139, %v450
    %v669 = vadd.f32 %v140, %v455
    %v670 = vadd.f32 %v141, %v460
    %v671 = vadd.f32 %v142, %v465
    %v672 = vadd.f32 %v143, %v470
    %v673 = vadd.f32 %v144, %v475
    %v674 = vadd.f32 %v145, %v480
    %v675 = vadd.f32 %v146, %v485
    %v676 = vadd.f32 %v147, %v490
    %v677 = vadd.f32 %v148, %v495
    %v678 = vadd.f32 %v149, %v500
    %v679 = vadd.f32 %v150, %v505
    %v680 = vadd.f32 %v151, %v510
    %v681 = vadd.f32 %v152, %v515
    %v682 = vadd.f32 %v153, %v520
    %v683 = vadd.f32 %v154, %v525
    %v684 = vadd.f32 %v155, %v530
    %v685 = vadd.f32 %v156, %v535
    %v686 = vadd.f32 %v157, %v540
    %v687 = vadd.f32 %v158, %v545
    %v688 = vadd.f32 %v159, %v550
    %v689 = vadd.f32 %v160, %v555
    %v690 = vadd.f32 %v161, %v560
    %v691 = vadd.f32 %v162, %v565
    %v692 = vadd.f32 %v163, %v570
    %v693 = vadd.f32 %v164, %v575
    %v694 = vadd.f32 %v165, %v580
    %v695 = vadd.f32 %v166, %v585
    %v696 = vadd.f32 %v167, %v590
    %v697 = vadd.f32 %v168, %v595
    %v698 = vadd.f32 %v169, %v600
    %v699 = vadd.f32 %v170, %v605
    %v700 = vadd.f32 %v171, %v610
    %v701 = vadd.f32 %v172, %v615
    %v702 = vadd.f32 %v173, %v620
    %v703 = vadd.f32 %v174, %v625
    %v704 = vadd.f32 %v175, %v630
    %v705 = vadd.f32 %v176, %v635
    %v706 = vadd.f32 %v177, %v640
    %707 = vst [vmem:[#allocation2] sm:$0xff] %v643
    %708 = vst [vmem:[#allocation2 + $0x8] sm:$0xff] %v644
    %709 = vst [vmem:[#allocation2 + $0x10] sm:$0xff] %v645
    %710 = vst [vmem:[#allocation2 + $0x18] sm:$0xff] %v646
    %711 = vst [vmem:[#allocation2 + $0x20] sm:$0xff] %v647
    %712 = vst [vmem:[#allocation2 + $0x28] sm:$0xff] %v648
    %713 = vst [vmem:[#allocation2 + $0x30] sm:$0xff] %v649
    %714 = vst [vmem:[#allocation2 + $0x38] sm:$0xff] %v650
    %715 = vst [vmem:[#allocation2 + $0x40] sm:$0xff] %v651
    %716 = vst [vmem:[#allocation2 + $0x48] sm:$0xff] %v652
    %717 = vst [vmem:[#allocation2 + $0x50] sm:$0xff] %v653
    %718 = vst [vmem:[#allocation2 + $0x58] sm:$0xff] %v654
    %719 = vst [vmem:[#allocation2 + $0x60] sm:$0xff] %v655
    %720 = vst [vmem:[#allocation2 + $0x68] sm:$0xff] %v656
    %721 = vst [vmem:[#allocation2 + $0x70] sm:$0xff] %v657
    %722 = vst [vmem:[#allocation2 + $0x78] sm:$0xff] %v658
    %723 = vst [vmem:[#allocation2 + $0x80] sm:$0xff] %v659
    %724 = vst [vmem:[#allocation2 + $0x88] sm:$0xff] %v660
    %725 = vst [vmem:[#allocation2 + $0x90] sm:$0xff] %v661
    %726 = vst [vmem:[#allocation2 + $0x98] sm:$0xff] %v662
    %727 = vst [vmem:[#allocation2 + $0xa0] sm:$0xff] %v663
    %728 = vst [vmem:[#allocation2 + $0xa8] sm:$0xff] %v664
    %729 = vst [vmem:[#allocation2 + $0xb0] sm:$0xff] %v665
    %730 = vst [vmem:[#allocation2 + $0xb8] sm:$0xff] %v666
    %731 = vst [vmem:[#allocation2 + $0xc0] sm:$0xff] %v667
    %732 = vst [vmem:[#allocation2 + $0xc8] sm:$0xff] %v668
    %733 = vst [vmem:[#allocation2 + $0xd0] sm:$0xff] %v669
    %734 = vst [vmem:[#allocation2 + $0xd8] sm:$0xff] %v670
    %735 = vst [vmem:[#allocation2 + $0xe0] sm:$0xff] %v671
    %736 = vst [vmem:[#allocation2 + $0xe8] sm:$0xff] %v672
    %737 = vst [vmem:[#allocation2 + $0xf0] sm:$0xff] %v673
    %738 = vst [vmem:[#allocation2 + $0xf8] sm:$0xff] %v674
    %739 = vst [vmem:[#allocation2 + $0x100] sm:$0xff] %v675
    %740 = vst [vmem:[#allocation2 + $0x108] sm:$0xff] %v676
    %741 = vst [vmem:[#allocation2 + $0x110] sm:$0xff] %v677
    %742 = vst [vmem:[#allocation2 + $0x118] sm:$0xff] %v678
    %743 = vst [vmem:[#allocation2 + $0x120] sm:$0xff] %v679
    %744 = vst [vmem:[#allocation2 + $0x128] sm:$0xff] %v680
    %745 = vst [vmem:[#allocation2 + $0x130] sm:$0xff] %v681
    %746 = vst [vmem:[#allocation2 + $0x138] sm:$0xff] %v682
    %747 = vst [vmem:[#allocation2 + $0x140] sm:$0xff] %v683
    %748 = vst [vmem:[#allocation2 + $0x148] sm:$0xff] %v684
    %749 = vst [vmem:[#allocation2 + $0x150] sm:$0xff] %v685
    %750 = vst [vmem:[#allocation2 + $0x158] sm:$0xff] %v686
    %751 = vst [vmem:[#allocation2 + $0x160] sm:$0xff] %v687
    %752 = vst [vmem:[#allocation2 + $0x168] sm:$0xff] %v688
    %753 = vst [vmem:[#allocation2 + $0x170] sm:$0xff] %v689
    %754 = vst [vmem:[#allocation2 + $0x178] sm:$0xff] %v690
    %755 = vst [vmem:[#allocation2 + $0x180] sm:$0xff] %v691
    %756 = vst [vmem:[#allocation2 + $0x188] sm:$0xff] %v692
    %757 = vst [vmem:[#allocation2 + $0x190] sm:$0xff] %v693
    %758 = vst [vmem:[#allocation2 + $0x198] sm:$0xff] %v694
    %759 = vst [vmem:[#allocation2 + $0x1a0] sm:$0xff] %v695
    %760 = vst [vmem:[#allocation2 + $0x1a8] sm:$0xff] %v696
    %761 = vst [vmem:[#allocation2 + $0x1b0] sm:$0xff] %v697
    %762 = vst [vmem:[#allocation2 + $0x1b8] sm:$0xff] %v698
    %763 = vst [vmem:[#allocation2 + $0x1c0] sm:$0xff] %v699
    %764 = vst [vmem:[#allocation2 + $0x1c8] sm:$0xff] %v700
    %765 = vst [vmem:[#allocation2 + $0x1d0] sm:$0xff] %v701
    %766 = vst [vmem:[#allocation2 + $0x1d8] sm:$0xff] %v702
    %767 = vst [vmem:[#allocation2 + $0x1e0] sm:$0xff] %v703
    %768 = vst [vmem:[#allocation2 + $0x1e8] sm:$0xff] %v704
    %769 = vst [vmem:[#allocation2 + $0x1f0] sm:$0xff] %v705
    %770 = vst [vmem:[#allocation2 + $0x1f8] sm:$0xff] %v706
    // Predicated region
    $region30: #{_matmul_bn.1} parent=1 // pred_check
      %p771 = pneg %p46
    $region31: #{_matmul_bn.1} parent=1 // pred_check_branch
      %773 = sbr.rel (%p771) target = $region33
    $region32: #{_matmul_bn.1} parent=1 // pred_region
      %v774 = vld [vmem:[#allocation2] sm:$0xff]
      %v775 = vld [vmem:[#allocation2 + $0x8] sm:$0xff]
      %v776 = vld [vmem:[#allocation2 + $0x10] sm:$0xff]
      %v777 = vld [vmem:[#allocation2 + $0x18] sm:$0xff]
      %v778 = vld [vmem:[#allocation2 + $0x20] sm:$0xff]
      %v779 = vld [vmem:[#allocation2 + $0x28] sm:$0xff]
      %v780 = vld [vmem:[#allocation2 + $0x30] sm:$0xff]
      %v781 = vld [vmem:[#allocation2 + $0x38] sm:$0xff]
      %v782 = vld [vmem:[#allocation2 + $0x40] sm:$0xff]
      %v783 = vld [vmem:[#allocation2 + $0x48] sm:$0xff]
      %v784 = vld [vmem:[#allocation2 + $0x50] sm:$0xff]
      %v785 = vld [vmem:[#allocation2 + $0x58] sm:$0xff]
      %v786 = vld [vmem:[#allocation2 + $0x60] sm:$0xff]
      %v787 = vld [vmem:[#allocation2 + $0x68] sm:$0xff]
      %v788 = vld [vmem:[#allocation2 + $0x70] sm:$0xff]
      %v789 = vld [vmem:[#allocation2 + $0x78] sm:$0xff]
      %v790 = vld [vmem:[#allocation2 + $0x80] sm:$0xff]
      %v791 = vld [vmem:[#allocation2 + $0x88] sm:$0xff]
      %v792 = vld [vmem:[#allocation2 + $0x90] sm:$0xff]
      %v793 = vld [vmem:[#allocation2 + $0x98] sm:$0xff]
      %v794 = vld [vmem:[#allocation2 + $0xa0] sm:$0xff]
      %v795 = vld [vmem:[#allocation2 + $0xa8] sm:$0xff]
      %v796 = vld [vmem:[#allocation2 + $0xb0] sm:$0xff]
      %v797 = vld [vmem:[#allocation2 + $0xb8] sm:$0xff]
      %v798 = vld [vmem:[#allocation2 + $0xc0] sm:$0xff]
      %v799 = vld [vmem:[#allocation2 + $0xc8] sm:$0xff]
      %v800 = vld [vmem:[#allocation2 + $0xd0] sm:$0xff]
      %v801 = vld [vmem:[#allocation2 + $0xd8] sm:$0xff]
      %v802 = vld [vmem:[#allocation2 + $0xe0] sm:$0xff]
      %v803 = vld [vmem:[#allocation2 + $0xe8] sm:$0xff]
      %v804 = vld [vmem:[#allocation2 + $0xf0] sm:$0xff]
      %v805 = vld [vmem:[#allocation2 + $0xf8] sm:$0xff]
      %v806 = vld [vmem:[#allocation2 + $0x100] sm:$0xff]
      %v807 = vld [vmem:[#allocation2 + $0x108] sm:$0xff]
      %v808 = vld [vmem:[#allocation2 + $0x110] sm:$0xff]
      %v809 = vld [vmem:[#allocation2 + $0x118] sm:$0xff]
      %v810 = vld [vmem:[#allocation2 + $0x120] sm:$0xff]
      %v811 = vld [vmem:[#allocation2 + $0x128] sm:$0xff]
      %v812 = vld [vmem:[#allocation2 + $0x130] sm:$0xff]
      %v813 = vld [vmem:[#allocation2 + $0x138] sm:$0xff]
      %v814 = vld [vmem:[#allocation2 + $0x140] sm:$0xff]
      %v815 = vld [vmem:[#allocation2 + $0x148] sm:$0xff]
      %v816 = vld [vmem:[#allocation2 + $0x150] sm:$0xff]
      %v817 = vld [vmem:[#allocation2 + $0x158] sm:$0xff]
      %v818 = vld [vmem:[#allocation2 + $0x160] sm:$0xff]
      %v819 = vld [vmem:[#allocation2 + $0x168] sm:$0xff]
      %v820 = vld [vmem:[#allocation2 + $0x170] sm:$0xff]
      %v821 = vld [vmem:[#allocation2 + $0x178] sm:$0xff]
      %v822 = vld [vmem:[#allocation2 + $0x180] sm:$0xff]
      %v823 = vld [vmem:[#allocation2 + $0x188] sm:$0xff]
      %v824 = vld [vmem:[#allocation2 + $0x190] sm:$0xff]
      %v825 = vld [vmem:[#allocation2 + $0x198] sm:$0xff]
      %v826 = vld [vmem:[#allocation2 + $0x1a0] sm:$0xff]
      %v827 = vld [vmem:[#allocation2 + $0x1a8] sm:$0xff]
      %v828 = vld [vmem:[#allocation2 + $0x1b0] sm:$0xff]
      %v829 = vld [vmem:[#allocation2 + $0x1b8] sm:$0xff]
      %v830 = vld [vmem:[#allocation2 + $0x1c0] sm:$0xff]
      %v831 = vld [vmem:[#allocation2 + $0x1c8] sm:$0xff]
      %v832 = vld [vmem:[#allocation2 + $0x1d0] sm:$0xff]
      %v833 = vld [vmem:[#allocation2 + $0x1d8] sm:$0xff]
      %v834 = vld [vmem:[#allocation2 + $0x1e0] sm:$0xff]
      %v835 = vld [vmem:[#allocation2 + $0x1e8] sm:$0xff]
      %v836 = vld [vmem:[#allocation2 + $0x1f0] sm:$0xff]
      %v837 = vld [vmem:[#allocation2 + $0x1f8] sm:$0xff]
      %v838 = vld [vmem:[%s2] sm:$0x1]
      %v840 = vlaneseq
      %v841 = vshrl.u32 %v840, 7
      %v842 = vsub.s32 0, %v841
      %v843 = vrot.slane %v838, %v842
      %v845 = vmul.f32 %v774, %v843
      %v846 = vmul.f32 %v775, %v843
      %v847 = vmul.f32 %v776, %v843
      %v848 = vmul.f32 %v777, %v843
      %v849 = vmul.f32 %v778, %v843
      %v850 = vmul.f32 %v779, %v843
      %v851 = vmul.f32 %v780, %v843
      %v852 = vmul.f32 %v781, %v843
      %v853 = vmul.f32 %v782, %v843
      %v854 = vmul.f32 %v783, %v843
      %v855 = vmul.f32 %v784, %v843
      %v856 = vmul.f32 %v785, %v843
      %v857 = vmul.f32 %v786, %v843
      %v858 = vmul.f32 %v787, %v843
      %v859 = vmul.f32 %v788, %v843
      %v860 = vmul.f32 %v789, %v843
      %v861 = vmul.f32 %v790, %v843
      %v862 = vmul.f32 %v791, %v843
      %v863 = vmul.f32 %v792, %v843
      %v864 = vmul.f32 %v793, %v843
      %v865 = vmul.f32 %v794, %v843
      %v866 = vmul.f32 %v795, %v843
      %v867 = vmul.f32 %v796, %v843
      %v868 = vmul.f32 %v797, %v843
      %v869 = vmul.f32 %v798, %v843
      %v870 = vmul.f32 %v799, %v843
      %v871 = vmul.f32 %v800, %v843
      %v872 = vmul.f32 %v801, %v843
      %v873 = vmul.f32 %v802, %v843
      %v874 = vmul.f32 %v803, %v843
      %v875 = vmul.f32 %v804, %v843
      %v876 = vmul.f32 %v805, %v843
      %v877 = vmul.f32 %v806, %v843
      %v878 = vmul.f32 %v807, %v843
      %v879 = vmul.f32 %v808, %v843
      %v880 = vmul.f32 %v809, %v843
      %v881 = vmul.f32 %v810, %v843
      %v882 = vmul.f32 %v811, %v843
      %v883 = vmul.f32 %v812, %v843
      %v884 = vmul.f32 %v813, %v843
      %v885 = vmul.f32 %v814, %v843
      %v886 = vmul.f32 %v815, %v843
      %v887 = vmul.f32 %v816, %v843
      %v888 = vmul.f32 %v817, %v843
      %v889 = vmul.f32 %v818, %v843
      %v890 = vmul.f32 %v819, %v843
      %v891 = vmul.f32 %v820, %v843
      %v892 = vmul.f32 %v821, %v843
      %v893 = vmul.f32 %v822, %v843
      %v894 = vmul.f32 %v823, %v843
      %v895 = vmul.f32 %v824, %v843
      %v896 = vmul.f32 %v825, %v843
      %v897 = vmul.f32 %v826, %v843
      %v898 = vmul.f32 %v827, %v843
      %v899 = vmul.f32 %v828, %v843
      %v900 = vmul.f32 %v829, %v843
      %v901 = vmul.f32 %v830, %v843
      %v902 = vmul.f32 %v831, %v843
      %v903 = vmul.f32 %v832, %v843
      %v904 = vmul.f32 %v833, %v843
      %v905 = vmul.f32 %v834, %v843
      %v906 = vmul.f32 %v835, %v843
      %v907 = vmul.f32 %v836, %v843
      %v908 = vmul.f32 %v837, %v843
      %v909 = vld [vmem:[%s3] sm:$0x1]
      %v911 = vlaneseq
      %v912 = vshrl.u32 %v911, 7
      %v913 = vsub.s32 0, %v912
      %v914 = vrot.slane %v909, %v913
      %v916 = vadd.f32 %v845, %v914
      %v917 = vadd.f32 %v846, %v914
      %v918 = vadd.f32 %v847, %v914
      %v919 = vadd.f32 %v848, %v914
      %v920 = vadd.f32 %v849, %v914
      %v921 = vadd.f32 %v850, %v914
      %v922 = vadd.f32 %v851, %v914
      %v923 = vadd.f32 %v852, %v914
      %v924 = vadd.f32 %v853, %v914
      %v925 = vadd.f32 %v854, %v914
      %v926 = vadd.f32 %v855, %v914
      %v927 = vadd.f32 %v856, %v914
      %v928 = vadd.f32 %v857, %v914
      %v929 = vadd.f32 %v858, %v914
      %v930 = vadd.f32 %v859, %v914
      %v931 = vadd.f32 %v860, %v914
      %v932 = vadd.f32 %v861, %v914
      %v933 = vadd.f32 %v862, %v914
      %v934 = vadd.f32 %v863, %v914
      %v935 = vadd.f32 %v864, %v914
      %v936 = vadd.f32 %v865, %v914
      %v937 = vadd.f32 %v866, %v914
      %v938 = vadd.f32 %v867, %v914
      %v939 = vadd.f32 %v868, %v914
      %v940 = vadd.f32 %v869, %v914
      %v941 = vadd.f32 %v870, %v914
      %v942 = vadd.f32 %v871, %v914
      %v943 = vadd.f32 %v872, %v914
      %v944 = vadd.f32 %v873, %v914
      %v945 = vadd.f32 %v874, %v914
      %v946 = vadd.f32 %v875, %v914
      %v947 = vadd.f32 %v876, %v914
      %v948 = vadd.f32 %v877, %v914
      %v949 = vadd.f32 %v878, %v914
      %v950 = vadd.f32 %v879, %v914
      %v951 = vadd.f32 %v880, %v914
      %v952 = vadd.f32 %v881, %v914
      %v953 = vadd.f32 %v882, %v914
      %v954 = vadd.f32 %v883, %v914
      %v955 = vadd.f32 %v884, %v914
      %v956 = vadd.f32 %v885, %v914
      %v957 = vadd.f32 %v886, %v914
      %v958 = vadd.f32 %v887, %v914
      %v959 = vadd.f32 %v888, %v914
      %v960 = vadd.f32 %v889, %v914
      %v961 = vadd.f32 %v890, %v914
      %v962 = vadd.f32 %v891, %v914
      %v963 = vadd.f32 %v892, %v914
      %v964 = vadd.f32 %v893, %v914
      %v965 = vadd.f32 %v894, %v914
      %v966 = vadd.f32 %v895, %v914
      %v967 = vadd.f32 %v896, %v914
      %v968 = vadd.f32 %v897, %v914
      %v969 = vadd.f32 %v898, %v914
      %v970 = vadd.f32 %v899, %v914
      %v971 = vadd.f32 %v900, %v914
      %v972 = vadd.f32 %v901, %v914
      %v973 = vadd.f32 %v902, %v914
      %v974 = vadd.f32 %v903, %v914
      %v975 = vadd.f32 %v904, %v914
      %v976 = vadd.f32 %v905, %v914
      %v977 = vadd.f32 %v906, %v914
      %v978 = vadd.f32 %v907, %v914
      %v979 = vadd.f32 %v908, %v914
      %980 = vst [vmem:[#allocation8] sm:$0xff] %v916
      %981 = vst [vmem:[#allocation8 + $0x8] sm:$0xff] %v917
      %982 = vst [vmem:[#allocation8 + $0x10] sm:$0xff] %v918
      %983 = vst [vmem:[#allocation8 + $0x18] sm:$0xff] %v919
      %984 = vst [vmem:[#allocation8 + $0x20] sm:$0xff] %v920
      %985 = vst [vmem:[#allocation8 + $0x28] sm:$0xff] %v921
      %986 = vst [vmem:[#allocation8 + $0x30] sm:$0xff] %v922
      %987 = vst [vmem:[#allocation8 + $0x38] sm:$0xff] %v923
      %988 = vst [vmem:[#allocation8 + $0x40] sm:$0xff] %v924
      %989 = vst [vmem:[#allocation8 + $0x48] sm:$0xff] %v925
      %990 = vst [vmem:[#allocation8 + $0x50] sm:$0xff] %v926
      %991 = vst [vmem:[#allocation8 + $0x58] sm:$0xff] %v927
      %992 = vst [vmem:[#allocation8 + $0x60] sm:$0xff] %v928
      %993 = vst [vmem:[#allocation8 + $0x68] sm:$0xff] %v929
      %994 = vst [vmem:[#allocation8 + $0x70] sm:$0xff] %v930
      %995 = vst [vmem:[#allocation8 + $0x78] sm:$0xff] %v931
      %996 = vst [vmem:[#allocation8 + $0x80] sm:$0xff] %v932
      %997 = vst [vmem:[#allocation8 + $0x88] sm:$0xff] %v933
      %998 = vst [vmem:[#allocation8 + $0x90] sm:$0xff] %v934
      %999 = vst [vmem:[#allocation8 + $0x98] sm:$0xff] %v935
      %1000 = vst [vmem:[#allocation8 + $0xa0] sm:$0xff] %v936
      %1001 = vst [vmem:[#allocation8 + $0xa8] sm:$0xff] %v937
      %1002 = vst [vmem:[#allocation8 + $0xb0] sm:$0xff] %v938
      %1003 = vst [vmem:[#allocation8 + $0xb8] sm:$0xff] %v939
      %1004 = vst [vmem:[#allocation8 + $0xc0] sm:$0xff] %v940
      %1005 = vst [vmem:[#allocation8 + $0xc8] sm:$0xff] %v941
      %1006 = vst [vmem:[#allocation8 + $0xd0] sm:$0xff] %v942
      %1007 = vst [vmem:[#allocation8 + $0xd8] sm:$0xff] %v943
      %1008 = vst [vmem:[#allocation8 + $0xe0] sm:$0xff] %v944
      %1009 = vst [vmem:[#allocation8 + $0xe8] sm:$0xff] %v945
      %1010 = vst [vmem:[#allocation8 + $0xf0] sm:$0xff] %v946
      %1011 = vst [vmem:[#allocation8 + $0xf8] sm:$0xff] %v947
      %1012 = vst [vmem:[#allocation8 + $0x100] sm:$0xff] %v948
      %1013 = vst [vmem:[#allocation8 + $0x108] sm:$0xff] %v949
      %1014 = vst [vmem:[#allocation8 + $0x110] sm:$0xff] %v950
      %1015 = vst [vmem:[#allocation8 + $0x118] sm:$0xff] %v951
      %1016 = vst [vmem:[#allocation8 + $0x120] sm:$0xff] %v952
      %1017 = vst [vmem:[#allocation8 + $0x128] sm:$0xff] %v953
      %1018 = vst [vmem:[#allocation8 + $0x130] sm:$0xff] %v954
      %1019 = vst [vmem:[#allocation8 + $0x138] sm:$0xff] %v955
      %1020 = vst [vmem:[#allocation8 + $0x140] sm:$0xff] %v956
      %1021 = vst [vmem:[#allocation8 + $0x148] sm:$0xff] %v957
      %1022 = vst [vmem:[#allocation8 + $0x150] sm:$0xff] %v958
      %1023 = vst [vmem:[#allocation8 + $0x158] sm:$0xff] %v959
      %1024 = vst [vmem:[#allocation8 + $0x160] sm:$0xff] %v960
      %1025 = vst [vmem:[#allocation8 + $0x168] sm:$0xff] %v961
      %1026 = vst [vmem:[#allocation8 + $0x170] sm:$0xff] %v962
      %1027 = vst [vmem:[#allocation8 + $0x178] sm:$0xff] %v963
      %1028 = vst [vmem:[#allocation8 + $0x180] sm:$0xff] %v964
      %1029 = vst [vmem:[#allocation8 + $0x188] sm:$0xff] %v965
      %1030 = vst [vmem:[#allocation8 + $0x190] sm:$0xff] %v966
      %1031 = vst [vmem:[#allocation8 + $0x198] sm:$0xff] %v967
      %1032 = vst [vmem:[#allocation8 + $0x1a0] sm:$0xff] %v968
      %1033 = vst [vmem:[#allocation8 + $0x1a8] sm:$0xff] %v969
      %1034 = vst [vmem:[#allocation8 + $0x1b0] sm:$0xff] %v970
      %1035 = vst [vmem:[#allocation8 + $0x1b8] sm:$0xff] %v971
      %1036 = vst [vmem:[#allocation8 + $0x1c0] sm:$0xff] %v972
      %1037 = vst [vmem:[#allocation8 + $0x1c8] sm:$0xff] %v973
      %1038 = vst [vmem:[#allocation8 + $0x1d0] sm:$0xff] %v974
      %1039 = vst [vmem:[#allocation8 + $0x1d8] sm:$0xff] %v975
      %1040 = vst [vmem:[#allocation8 + $0x1e0] sm:$0xff] %v976
      %1041 = vst [vmem:[#allocation8 + $0x1e8] sm:$0xff] %v977
      %1042 = vst [vmem:[#allocation8 + $0x1f0] sm:$0xff] %v978
      %1043 = vst [vmem:[#allocation8 + $0x1f8] sm:$0xff] %v979
    $region33: #{_matmul_bn.1} parent=1 // pred_fallthru
      _
    // Predicated region
    $region34: #{_matmul_bn.1} parent=1 // pred_check
      _
    $region35: #{_matmul_bn.1} parent=1 // pred_check_branch
      %1045 = sbr.rel (0) target = $region37
    $region36: #{_matmul_bn.1} parent=1 // pred_region
      %s1047 = ssub.s32 8192, 8192
      %1048 = vsyncadd [#allocation5], %s1047
      %s1049 = sshll.u32 [#allocation8], 4
      %s1050 = int_to_ptr.vmem [resolvable:$true] %s1049
      %1055 = dma.vmem_to_hbm [thread:$0]  %s1050, 8192, %s4, [#allocation5], 128, 128, 8
    $region37: #{_matmul_bn.1} parent=1 // pred_fallthru
      _
    // Predicated region
    $region38: #{_matmul_bn.1} parent=1 // pred_check
      _
    $region39: #{_matmul_bn.1} parent=1 // pred_check_branch
      %1057 = sbr.rel (0) target = $region41
    $region40: #{_matmul_bn.1} parent=1 // pred_region
      %1058 = dma.done [#allocation5], 8192
    $region41: #{_matmul_bn.1} parent=1 // pred_fallthru
      _
    %1059 = vsyncpa [#allocation4], 1
    %1060 = vsyncpa [#allocation7], 1
    %1061 = vsyncpa [#allocation5], 1

</llo_original>
